<compile_context>
chip_gen: v7x
topology: tpu7x:2x2x1
jax: 0.10.0
libtpu: 0.0.40
codegen_flags: <defaults>
</compile_context>

<pallas_src>
import functools

import jax
import jax.numpy as jnp
from jax.experimental import pallas as pl
from jax.experimental.pallas import tpu as pltpu


# ---------------------------------------------------------------------------
# Kernel
# ---------------------------------------------------------------------------
def basic_block_kernel(x_ref, w1_ref, w2_ref, s1_ref, s2_ref, out_ref, pad_ref,
                       *, NB, H, WC):
    """Fused BasicBlock for NB images (one grid step).

    x_ref  : (NB, H, WC) bf16 lane-folded input (also the residual)
    w*_ref : (3*WC, WC) bf16 block-banded weights (BN scale folded in)
    s*_ref : (1, WC) f32 per-lane BN shifts
    out_ref: (NB, H, WC) f32 output
    pad_ref: (NB, H+2, WC) bf16 scratch with zero border rows
    """
    M = NB * H
    zrow = jnp.zeros((NB, 1, WC), jnp.bfloat16)

    # Zero borders once; interior is overwritten per conv (borders stay zero).
    pad_ref[:, 0:1, :] = zrow
    pad_ref[:, H + 1:H + 2, :] = zrow
    pad_ref[:, 1:H + 1, :] = x_ref[...]

    def conv3x3(w_ref):
        # 3 accumulating MXU dots over the kh taps; kw taps + W-padding are
        # already folded into the banded weight columns.
        acc = jnp.zeros((M, WC), jnp.float32)
        for kh in range(3):                                   # static unroll
            taps = pad_ref[:, kh:kh + H, :].reshape(M, WC)    # bf16
            acc = acc + jnp.dot(taps, w_ref[kh * WC:(kh + 1) * WC, :],
                                preferred_element_type=jnp.float32)
        return acc

    # conv1 + bn1 (shift) + relu  -- activation stays in VMEM
    h1 = jnp.maximum(conv3x3(w1_ref) + s1_ref[...], 0.0)      # (M, WC) f32
    pad_ref[:, 1:H + 1, :] = h1.astype(jnp.bfloat16).reshape(NB, H, WC)

    # conv2 + bn2 (shift) + residual add + relu
    resid = x_ref[...].astype(jnp.float32).reshape(M, WC)
    y = conv3x3(w2_ref) + s2_ref[...] + resid
    out_ref[...] = jnp.maximum(y, 0.0).reshape(NB, H, WC).astype(out_ref.dtype)


# ---------------------------------------------------------------------------
# Wrapper-side parameter preparation
# ---------------------------------------------------------------------------
def fold_bn(gamma, beta, running_mean, running_var, eps=1e-5):
    scale = gamma / jnp.sqrt(running_var + eps)
    shift = beta - running_mean * scale
    return scale, shift


def _expand_weight(w_hwio, scale, W):
    """(3,3,Cin,Cout) HWIO weight -> (3*W*Cin, W*Cout) bf16 block-banded matrix.

    Folds the BN scale into Cout and the kw taps (incl. zero padding along W)
    into a block-banded structure over the lane-folded W dimension.  kh taps
    are stacked along the K dimension (rows [kh*W*Cin, (kh+1)*W*Cin)).
    """
    _, _, C, Cout = w_hwio.shape
    wf = (w_hwio * scale).astype(jnp.float32)                  # fold BN scale
    wi = jnp.arange(W)[None, :, None]                          # (1, W, 1)
    wo = jnp.arange(W)[None, None, :]                          # (1, 1, W)
    kw = jnp.arange(3)[:, None, None]                          # (3, 1, 1)
    # sel[kw, wi, wo] = 1 iff input column wi feeds output column wo via tap kw
    sel = (wi == wo + kw - 1).astype(jnp.float32)              # (3, W, W)
    big = jnp.einsum("kwv,hkio->hwivo", sel, wf)               # (3, W, C, W, Cout)
    return big.reshape(3 * W * C, W * Cout).astype(jnp.bfloat16)


def basic_block_forward(x_nchw, params, *, images_per_block=None):
    """BasicBlock forward (stride=1, downsample=None), NCHW in / NCHW out."""
    N, C, H, W = x_nchw.shape
    assert params["w1"].shape == (3, 3, C, C), "block requires Cin == Cout"
    WC = W * C

    # Choose how many images share one grid step: fill the MXU M dimension
    # (target >= 256 rows) while keeping NB a divisor of N.  For v7x, pass
    # images_per_block=N//2 explicitly to get an even, 2-core "parallel" grid.
    if images_per_block is None:
        images_per_block = min(N, max(1, 256 // max(H, 1)))
    NB = max(1, min(N, images_per_block))
    while N % NB:
        NB -= 1
    grid = (N // NB,)

    # NCHW -> lane-folded NHWC (N, H, W*C); bf16 storage (half the HBM read).
    x = jnp.transpose(x_nchw, (0, 2, 3, 1)).reshape(N, H, WC).astype(jnp.bfloat16)

    s1, b1 = fold_bn(params["bn1_gamma"], params["bn1_beta"],
                     params["bn1_mean"], params["bn1_var"])
    s2, b2 = fold_bn(params["bn2_gamma"], params["bn2_beta"],
                     params["bn2_mean"], params["bn2_var"])

    w1 = _expand_weight(params["w1"], s1, W)                   # (3*WC, WC) bf16
    w2 = _expand_weight(params["w2"], s2, W)
    sh1 = jnp.tile(b1, W).reshape(1, WC).astype(jnp.float32)   # per-lane BN shift
    sh2 = jnp.tile(b2, W).reshape(1, WC).astype(jnp.float32)

    kernel = functools.partial(basic_block_kernel, NB=NB, H=H, WC=WC)

    # CostEstimate includes the zero-band flops of the banded weight.
    flops = 2 * 2 * (N * H) * (3 * WC) * WC
    bytes_accessed = (N * H * WC * 2 + N * H * WC * 4
                      + 2 * (3 * WC) * WC * 2 + 2 * WC * 4)

    out = pl.pallas_call(
        kernel,
        out_shape=jax.ShapeDtypeStruct((N, H, WC), jnp.float32),
        grid=grid,
        in_specs=[
            pl.BlockSpec((NB, H, WC), lambda n: (n, 0, 0)),    # x / residual
            pl.BlockSpec((3 * WC, WC), lambda n: (0, 0)),      # w1 (fetched once)
            pl.BlockSpec((3 * WC, WC), lambda n: (0, 0)),      # w2 (fetched once)
            pl.BlockSpec((1, WC), lambda n: (0, 0)),           # bn1 shift
            pl.BlockSpec((1, WC), lambda n: (0, 0)),           # bn2 shift
        ],
        out_specs=pl.BlockSpec((NB, H, WC), lambda n: (n, 0, 0)),
        scratch_shapes=[pltpu.VMEM((NB, H + 2, WC), jnp.bfloat16)],
        compiler_params=pltpu.CompilerParams(
            dimension_semantics=("parallel",)),
        cost_estimate=pl.CostEstimate(
            flops=flops, transcendentals=0, bytes_accessed=bytes_accessed),
    )(x, w1, w2, sh1, sh2)

    out = out.reshape(N, H, W, C)
    return jnp.transpose(out, (0, 3, 1, 2))                    # NHWC -> NCHW


# ---------------------------------------------------------------------------
# Pure-JAX reference (same bf16 activation storage / operand rounding,
# f32 accumulation, BN shift, residual add and ReLU)
# ---------------------------------------------------------------------------
def _reference_forward(x_nchw, params):
    x = jnp.transpose(x_nchw, (0, 2, 3, 1))
    x = x.astype(jnp.bfloat16).astype(jnp.float32)             # bf16 storage
    dn = jax.lax.conv_dimension_numbers(x.shape, params["w1"].shape,
                                        ("NHWC", "HWIO", "NHWC"))

    def conv(inp, w):
        return jax.lax.conv_general_dilated(
            inp.astype(jnp.bfloat16), w.astype(jnp.bfloat16), (1, 1), "SAME",
            dimension_numbers=dn, preferred_element_type=jnp.float32)

    s1, b1 = fold_bn(params["bn1_gamma"], params["bn1_beta"],
                     params["bn1_mean"], params["bn1_var"])
    s2, b2 = fold_bn(params["bn2_gamma"], params["bn2_beta"],
                     params["bn2_mean"], params["bn2_var"])

    h1 = jnp.maximum(conv(x, params["w1"] * s1) + b1, 0.0)
    out = jnp.maximum(conv(h1, params["w2"] * s2) + b2 + x, 0.0)
    return jnp.transpose(out, (0, 3, 1, 2))


# ---------------------------------------------------------------------------
if __name__ == "__main__":
    # batch=2, channels=8, spatial=16x16  ->  W*C = 128 (lane-dense),
    # M = N*H = 32 rows per matmul, whole batch in a single grid step.
    # conv2 in the PyTorch module takes `in_channel` inputs, so the block is
    # only valid when in_channel == out_channel (as here).
    N, C, H, W = 2, 8, 16, 16

    key = jax.random.PRNGKey(0)
    ks = jax.random.split(key, 11)

    params = {
        # weights in HWIO layout (kh, kw, Cin, Cout)
        "w1": jax.random.normal(ks[0], (3, 3, C, C), jnp.float32) * 0.1,
        "w2": jax.random.normal(ks[1], (3, 3, C, C), jnp.float32) * 0.1,
        "bn1_gamma": 1.0 + 0.1 * jax.random.normal(ks[2], (C,), jnp.float32),
        "bn1_beta": 0.1 * jax.random.normal(ks[3], (C,), jnp.float32),
        "bn1_mean": 0.1 * jax.random.normal(ks[4], (C,), jnp.float32),
        "bn1_var": 0.5 + jnp.abs(jax.random.normal(ks[5], (C,), jnp.float32)),
        "bn2_gamma": 1.0 + 0.1 * jax.random.normal(ks[6], (C,), jnp.float32),
        "bn2_beta": 0.1 * jax.random.normal(ks[7], (C,), jnp.float32),
        "bn2_mean": 0.1 * jax.random.normal(ks[8], (C,), jnp.float32),
        "bn2_var": 0.5 + jnp.abs(jax.random.normal(ks[9], (C,), jnp.float32)),
    }

    x = jax.random.normal(ks[10], (N, C, H, W), jnp.float32)

    out = jax.block_until_ready(jax.jit(basic_block_forward)(x, params))
    ref = jax.block_until_ready(jax.jit(_reference_forward)(x, params))

    assert out.shape == (N, C, H, W)
    err = float(jnp.max(jnp.abs(out - ref)))
    assert err < 2e-3, f"max abs error {err}"

    print("KERNEL_OK")
</pallas_src>

<mosaic_0001>
module attributes {stable_mosaic.version = 11 : i64} {
  func.func @basic_block_kernel(%arg0: i32, %arg1: memref<2x16x128xbf16, #tpu.memory_space<vmem>>, %arg2: memref<384x128xbf16, #tpu.memory_space<vmem>>, %arg3: memref<384x128xbf16, #tpu.memory_space<vmem>>, %arg4: memref<1x128xf32, #tpu.memory_space<vmem>>, %arg5: memref<1x128xf32, #tpu.memory_space<vmem>>, %arg6: memref<2x16x128xf32, #tpu.memory_space<vmem>>, %arg7: memref<2x18x128xbf16, #tpu.memory_space<vmem>>) attributes {dimension_semantics = [#tpu.dimension_semantics<parallel>], iteration_bounds = array<i64: 1>, scalar_prefetch = 0 : i64, scratch_operands = 1 : i64, tpu.core_type = #tpu.core_type<tc>, window_params = [{transform_indices = @transform_0, window_bounds = array<i64: 2, 16, 128>}, {pipeline_mode = #tpu.pipeline_mode<synchronous>, transform_indices = @transform_1, window_bounds = array<i64: 384, 128>}, {pipeline_mode = #tpu.pipeline_mode<synchronous>, transform_indices = @transform_2, window_bounds = array<i64: 384, 128>}, {pipeline_mode = #tpu.pipeline_mode<synchronous>, transform_indices = @transform_3, window_bounds = array<i64: 1, 128>}, {pipeline_mode = #tpu.pipeline_mode<synchronous>, transform_indices = @transform_4, window_bounds = array<i64: 1, 128>}, {transform_indices = @transform_5, window_bounds = array<i64: 2, 16, 128>}]} {
    %cst = arith.constant 0.000000e+00 : bf16
    %0 = vector.broadcast %cst : bf16 to vector<2x1x128xbf16>
    %c0 = arith.constant 0 : index
    %c0_0 = arith.constant 0 : index
    %c0_1 = arith.constant 0 : index
    %1 = vector.load %arg7[%c0, %c0_0, %c0_1] : memref<2x18x128xbf16, #tpu.memory_space<vmem>>, vector<2x1x128xbf16>
    tpu.vector_store %arg7[%c0, %c0_0, %c0_1], %0 {strides = array<i32>} : memref<2x18x128xbf16, #tpu.memory_space<vmem>>, vector<2x1x128xbf16>,
    %c0_2 = arith.constant 0 : index
    %c17 = arith.constant 17 : index
    %c0_3 = arith.constant 0 : index
    %2 = vector.load %arg7[%c0_2, %c17, %c0_3] : memref<2x18x128xbf16, #tpu.memory_space<vmem>>, vector<2x1x128xbf16>
    tpu.vector_store %arg7[%c0_2, %c17, %c0_3], %0 {strides = array<i32>} : memref<2x18x128xbf16, #tpu.memory_space<vmem>>, vector<2x1x128xbf16>,
    %c0_4 = arith.constant 0 : index
    %c0_5 = arith.constant 0 : index
    %c0_6 = arith.constant 0 : index
    %3 = vector.load %arg1[%c0_4, %c0_5, %c0_6] : memref<2x16x128xbf16, #tpu.memory_space<vmem>>, vector<2x16x128xbf16>
    %c0_7 = arith.constant 0 : index
    %c1 = arith.constant 1 : index
    %c0_8 = arith.constant 0 : index
    %4 = vector.load %arg7[%c0_7, %c1, %c0_8] : memref<2x18x128xbf16, #tpu.memory_space<vmem>>, vector<2x16x128xbf16>
    tpu.vector_store %arg7[%c0_7, %c1, %c0_8], %3 {strides = array<i32>} : memref<2x18x128xbf16, #tpu.memory_space<vmem>>, vector<2x16x128xbf16>,
    %cst_9 = arith.constant 0.000000e+00 : f32
    %5 = vector.broadcast %cst_9 : f32 to vector<32x128xf32>
    %c0_10 = arith.constant 0 : index
    %c0_11 = arith.constant 0 : index
    %c0_12 = arith.constant 0 : index
    %6 = vector.load %arg7[%c0_10, %c0_11, %c0_12] : memref<2x18x128xbf16, #tpu.memory_space<vmem>>, vector<2x16x128xbf16>
    %7 = vector.shape_cast %6 : vector<2x16x128xbf16> to vector<32x128xbf16>
    %c0_13 = arith.constant 0 : index
    %c0_14 = arith.constant 0 : index
    %8 = vector.load %arg2[%c0_13, %c0_14] : memref<384x128xbf16, #tpu.memory_space<vmem>>, vector<128x128xbf16>
    %cst_15 = arith.constant dense<0.000000e+00> : vector<32x128xf32>
    %9 = tpu.matmul %7, %8, %cst_15 {dimension_numbers = #tpu.dot_dimension_numbers<[1], [0], [0], [1], [0, 0, 1, 1], [], []>} : vector<32x128xbf16>, vector<128x128xbf16>, vector<32x128xf32> -> vector<32x128xf32>
    %10 = arith.addf %5, %9 : vector<32x128xf32>
    %c0_16 = arith.constant 0 : index
    %c1_17 = arith.constant 1 : index
    %c0_18 = arith.constant 0 : index
    %11 = vector.load %arg7[%c0_16, %c1_17, %c0_18] : memref<2x18x128xbf16, #tpu.memory_space<vmem>>, vector<2x16x128xbf16>
    %12 = vector.shape_cast %11 : vector<2x16x128xbf16> to vector<32x128xbf16>
    %c128 = arith.constant 128 : index
    %c0_19 = arith.constant 0 : index
    %13 = vector.load %arg2[%c128, %c0_19] : memref<384x128xbf16, #tpu.memory_space<vmem>>, vector<128x128xbf16>
    %cst_20 = arith.constant dense<0.000000e+00> : vector<32x128xf32>
    %14 = tpu.matmul %12, %13, %cst_20 {dimension_numbers = #tpu.dot_dimension_numbers<[1], [0], [0], [1], [0, 0, 1, 1], [], []>} : vector<32x128xbf16>, vector<128x128xbf16>, vector<32x128xf32> -> vector<32x128xf32>
    %15 = arith.addf %10, %14 : vector<32x128xf32>
    %c0_21 = arith.constant 0 : index
    %c2 = arith.constant 2 : index
    %c0_22 = arith.constant 0 : index
    %16 = vector.load %arg7[%c0_21, %c2, %c0_22] : memref<2x18x128xbf16, #tpu.memory_space<vmem>>, vector<2x16x128xbf16>
    %17 = vector.shape_cast %16 : vector<2x16x128xbf16> to vector<32x128xbf16>
    %c256 = arith.constant 256 : index
    %c0_23 = arith.constant 0 : index
    %18 = vector.load %arg2[%c256, %c0_23] : memref<384x128xbf16, #tpu.memory_space<vmem>>, vector<128x128xbf16>
    %cst_24 = arith.constant dense<0.000000e+00> : vector<32x128xf32>
    %19 = tpu.matmul %17, %18, %cst_24 {dimension_numbers = #tpu.dot_dimension_numbers<[1], [0], [0], [1], [0, 0, 1, 1], [], []>} : vector<32x128xbf16>, vector<128x128xbf16>, vector<32x128xf32> -> vector<32x128xf32>
    %20 = arith.addf %15, %19 : vector<32x128xf32>
    %c0_25 = arith.constant 0 : index
    %c0_26 = arith.constant 0 : index
    %21 = vector.load %arg4[%c0_25, %c0_26] : memref<1x128xf32, #tpu.memory_space<vmem>>, vector<1x128xf32>
    %22 = vector.broadcast %21 : vector<1x128xf32> to vector<32x128xf32>
    %23 = arith.addf %20, %22 : vector<32x128xf32>
    %cst_27 = arith.constant 0.000000e+00 : f32
    %24 = vector.broadcast %cst_27 : f32 to vector<32x128xf32>
    %25 = arith.maximumf %23, %24 : vector<32x128xf32>
    %26 = arith.truncf %25 : vector<32x128xf32> to vector<32x128xbf16>
    %27 = vector.shape_cast %26 : vector<32x128xbf16> to vector<2x16x128xbf16>
    %c0_28 = arith.constant 0 : index
    %c1_29 = arith.constant 1 : index
    %c0_30 = arith.constant 0 : index
    %28 = vector.load %arg7[%c0_28, %c1_29, %c0_30] : memref<2x18x128xbf16, #tpu.memory_space<vmem>>, vector<2x16x128xbf16>
    tpu.vector_store %arg7[%c0_28, %c1_29, %c0_30], %27 {strides = array<i32>} : memref<2x18x128xbf16, #tpu.memory_space<vmem>>, vector<2x16x128xbf16>,
    %c0_31 = arith.constant 0 : index
    %c0_32 = arith.constant 0 : index
    %c0_33 = arith.constant 0 : index
    %29 = vector.load %arg1[%c0_31, %c0_32, %c0_33] : memref<2x16x128xbf16, #tpu.memory_space<vmem>>, vector<2x16x128xbf16>
    %30 = arith.extf %29 : vector<2x16x128xbf16> to vector<2x16x128xf32>
    %31 = vector.shape_cast %30 : vector<2x16x128xf32> to vector<32x128xf32>
    %cst_34 = arith.constant 0.000000e+00 : f32
    %32 = vector.broadcast %cst_34 : f32 to vector<32x128xf32>
    %c0_35 = arith.constant 0 : index
    %c0_36 = arith.constant 0 : index
    %c0_37 = arith.constant 0 : index
    %33 = vector.load %arg7[%c0_35, %c0_36, %c0_37] : memref<2x18x128xbf16, #tpu.memory_space<vmem>>, vector<2x16x128xbf16>
    %34 = vector.shape_cast %33 : vector<2x16x128xbf16> to vector<32x128xbf16>
    %c0_38 = arith.constant 0 : index
    %c0_39 = arith.constant 0 : index
    %35 = vector.load %arg3[%c0_38, %c0_39] : memref<384x128xbf16, #tpu.memory_space<vmem>>, vector<128x128xbf16>
    %cst_40 = arith.constant dense<0.000000e+00> : vector<32x128xf32>
    %36 = tpu.matmul %34, %35, %cst_40 {dimension_numbers = #tpu.dot_dimension_numbers<[1], [0], [0], [1], [0, 0, 1, 1], [], []>} : vector<32x128xbf16>, vector<128x128xbf16>, vector<32x128xf32> -> vector<32x128xf32>
    %37 = arith.addf %32, %36 : vector<32x128xf32>
    %c0_41 = arith.constant 0 : index
    %c1_42 = arith.constant 1 : index
    %c0_43 = arith.constant 0 : index
    %38 = vector.load %arg7[%c0_41, %c1_42, %c0_43] : memref<2x18x128xbf16, #tpu.memory_space<vmem>>, vector<2x16x128xbf16>
    %39 = vector.shape_cast %38 : vector<2x16x128xbf16> to vector<32x128xbf16>
    %c128_44 = arith.constant 128 : index
    %c0_45 = arith.constant 0 : index
    %40 = vector.load %arg3[%c128_44, %c0_45] : memref<384x128xbf16, #tpu.memory_space<vmem>>, vector<128x128xbf16>
    %cst_46 = arith.constant dense<0.000000e+00> : vector<32x128xf32>
    %41 = tpu.matmul %39, %40, %cst_46 {dimension_numbers = #tpu.dot_dimension_numbers<[1], [0], [0], [1], [0, 0, 1, 1], [], []>} : vector<32x128xbf16>, vector<128x128xbf16>, vector<32x128xf32> -> vector<32x128xf32>
    %42 = arith.addf %37, %41 : vector<32x128xf32>
    %c0_47 = arith.constant 0 : index
    %c2_48 = arith.constant 2 : index
    %c0_49 = arith.constant 0 : index
    %43 = vector.load %arg7[%c0_47, %c2_48, %c0_49] : memref<2x18x128xbf16, #tpu.memory_space<vmem>>, vector<2x16x128xbf16>
    %44 = vector.shape_cast %43 : vector<2x16x128xbf16> to vector<32x128xbf16>
    %c256_50 = arith.constant 256 : index
    %c0_51 = arith.constant 0 : index
    %45 = vector.load %arg3[%c256_50, %c0_51] : memref<384x128xbf16, #tpu.memory_space<vmem>>, vector<128x128xbf16>
    %cst_52 = arith.constant dense<0.000000e+00> : vector<32x128xf32>
    %46 = tpu.matmul %44, %45, %cst_52 {dimension_numbers = #tpu.dot_dimension_numbers<[1], [0], [0], [1], [0, 0, 1, 1], [], []>} : vector<32x128xbf16>, vector<128x128xbf16>, vector<32x128xf32> -> vector<32x128xf32>
    %47 = arith.addf %42, %46 : vector<32x128xf32>
    %c0_53 = arith.constant 0 : index
    %c0_54 = arith.constant 0 : index
    %48 = vector.load %arg5[%c0_53, %c0_54] : memref<1x128xf32, #tpu.memory_space<vmem>>, vector<1x128xf32>
    %49 = vector.broadcast %48 : vector<1x128xf32> to vector<32x128xf32>
    %50 = arith.addf %47, %49 : vector<32x128xf32>
    %51 = arith.addf %50, %31 : vector<32x128xf32>
    %cst_55 = arith.constant 0.000000e+00 : f32
    %52 = vector.broadcast %cst_55 : f32 to vector<32x128xf32>
    %53 = arith.maximumf %51, %52 : vector<32x128xf32>
    %54 = vector.shape_cast %53 : vector<32x128xf32> to vector<2x16x128xf32>
    %c0_56 = arith.constant 0 : index
    %c0_57 = arith.constant 0 : index
    %c0_58 = arith.constant 0 : index
    %55 = vector.load %arg6[%c0_56, %c0_57, %c0_58] : memref<2x16x128xf32, #tpu.memory_space<vmem>>, vector<2x16x128xf32>
    tpu.vector_store %arg6[%c0_56, %c0_57, %c0_58], %54 {strides = array<i32>} : memref<2x16x128xf32, #tpu.memory_space<vmem>>, vector<2x16x128xf32>,
    return
  }
  func.func @transform_0(%arg0: i32) -> (i32, i32, i32) {
    %c0_i32 = arith.constant 0 : i32
    %c0_i32_0 = arith.constant 0 : i32
    %c0_i32_1 = arith.constant 0 : i32
    return %arg0, %c0_i32, %c0_i32_0 : i32, i32, i32
  }
  func.func @transform_1(%arg0: i32) -> (i32, i32) {
    %c0_i32 = arith.constant 0 : i32
    %c0_i32_0 = arith.constant 0 : i32
    %c0_i32_1 = arith.constant 0 : i32
    return %c0_i32, %c0_i32_0 : i32, i32
  }
  func.func @transform_2(%arg0: i32) -> (i32, i32) {
    %c0_i32 = arith.constant 0 : i32
    %c0_i32_0 = arith.constant 0 : i32
    %c0_i32_1 = arith.constant 0 : i32
    return %c0_i32, %c0_i32_0 : i32, i32
  }
  func.func @transform_3(%arg0: i32) -> (i32, i32) {
    %c0_i32 = arith.constant 0 : i32
    %c0_i32_0 = arith.constant 0 : i32
    %c0_i32_1 = arith.constant 0 : i32
    return %c0_i32, %c0_i32_0 : i32, i32
  }
  func.func @transform_4(%arg0: i32) -> (i32, i32) {
    %c0_i32 = arith.constant 0 : i32
    %c0_i32_0 = arith.constant 0 : i32
    %c0_i32_1 = arith.constant 0 : i32
    return %c0_i32, %c0_i32_0 : i32, i32
  }
  func.func @transform_5(%arg0: i32) -> (i32, i32, i32) {
    %c0_i32 = arith.constant 0 : i32
    %c0_i32_0 = arith.constant 0 : i32
    %c0_i32_1 = arith.constant 0 : i32
    return %arg0, %c0_i32, %c0_i32_0 : i32, i32, i32
  }
}

</mosaic_0001>

<llo_original>
// kernel: tile.13
$region0: #{tile.13}
  #allocation0 [shape = 's32[1]{0}', space=sflag, size = 0x4, scoped, tag = 'scoped memory for tile.13']
  %s0 = inlined_call_operand.vmem [shape: f32[8], index: 0, kind: input, shape index: {}]
  %s1 = inlined_call_operand.vmem [shape: f32[16,8], index: 1, kind: output, shape index: {}]
  // Predicated region
  $region2: #{tile.13} parent=0 // pred_check
    _
  $region3: #{tile.13} parent=0 // pred_check_branch
    %3 = sbr.rel (0) target = $region5
  $region4: #{tile.13} parent=0 // pred_region
    _
  $region5: #{tile.13} parent=0 // pred_fallthru
    _
  %v4 = vld [vmem:[%s0] ss:$0 sm:$0xff]
  %5 = vst [vmem:[%s1] sm:$0xff] %v4
  %s6 = scalar_lea.vmem %s1, 8
  %7 = vst [vmem:[%s6] sm:$0xff] %v4

// kernel: tile.14
$region0: #{tile.14}
  %s0 = inlined_call_operand.vmem [shape: f32[16,8], index: 0, kind: input, shape index: {}]
  %s1 = inlined_call_operand.vmem [shape: f32[1,128], index: 1, kind: output, shape index: {}]
  $region1: #{tile.14} parent=0
    #allocation0 [shape = 'u8[4096]{0}', space=vmem, size = 0x1000, scoped, tag = 'scoped mem for output reshape']
    %v2 = vld [vmem:[%s0] sm:$0x1]
    %vm3 = vcmask 64512
    %4 = vst.msk [vmem:[#allocation0] sm:$0x1] %vm3, %v2
    %s5 = scalar_lea.vmem %s0, 15
    %v6 = vld [vmem:[%s5] sm:$0x1]
    %7 = vrot.lane.b32.xlu0 %v6, 120
    %v8 = vpop.permute.xlu0 %7
    %vm9 = vcmask 1048512
    %10 = vst.msk [vmem:[#allocation0] sm:$0x1] %vm9, %v8
    %s11 = scalar_lea.vmem %s0, 14
    %v12 = vld [vmem:[%s11] sm:$0x1]
    %13 = vrot.lane.b32.xlu0 %v12, 112
    %v14 = vpop.permute.xlu0 %13
    %vm15 = vcmask 982912
    %16 = vst.msk [vmem:[#allocation0] sm:$0x1] %vm15, %v14
    %s17 = scalar_lea.vmem %s0, 13
    %v18 = vld [vmem:[%s17] sm:$0x1]
    %19 = vrot.lane.b32.xlu0 %v18, 104
    %v20 = vpop.permute.xlu0 %19
    %vm21 = vcmask 917312
    %22 = vst.msk [vmem:[#allocation0] sm:$0x1] %vm21, %v20
    %s23 = scalar_lea.vmem %s0, 12
    %v24 = vld [vmem:[%s23] sm:$0x1]
    %25 = vrot.lane.b32.xlu0 %v24, 96
    %v26 = vpop.permute.xlu0 %25
    %vm27 = vcmask 851712
    %28 = vst.msk [vmem:[#allocation0] sm:$0x1] %vm27, %v26
    %s29 = scalar_lea.vmem %s0, 11
    %v30 = vld [vmem:[%s29] sm:$0x1]
    %31 = vrot.lane.b32.xlu0 %v30, 88
    %v32 = vpop.permute.xlu0 %31
    %vm33 = vcmask 786112
    %34 = vst.msk [vmem:[#allocation0] sm:$0x1] %vm33, %v32
    %s35 = scalar_lea.vmem %s0, 10
    %v36 = vld [vmem:[%s35] sm:$0x1]
    %37 = vrot.lane.b32.xlu0 %v36, 80
    %v38 = vpop.permute.xlu0 %37
    %vm39 = vcmask 720512
    %40 = vst.msk [vmem:[#allocation0] sm:$0x1] %vm39, %v38
    %s41 = scalar_lea.vmem %s0, 9
    %v42 = vld [vmem:[%s41] sm:$0x1]
    %43 = vrot.lane.b32.xlu0 %v42, 72
    %v44 = vpop.permute.xlu0 %43
    %vm45 = vcmask 654912
    %46 = vst.msk [vmem:[#allocation0] sm:$0x1] %vm45, %v44
    %s47 = scalar_lea.vmem %s0, 8
    %v48 = vld [vmem:[%s47] sm:$0x1]
    %49 = vrot.lane.b32.xlu0 %v48, 64
    %v50 = vpop.permute.xlu0 %49
    %vm51 = vcmask 589312
    %52 = vst.msk [vmem:[#allocation0] sm:$0x1] %vm51, %v50
    %s53 = scalar_lea.vmem %s0, 7
    %v54 = vld [vmem:[%s53] sm:$0x1]
    %55 = vrot.lane.b32.xlu0 %v54, 56
    %v56 = vpop.permute.xlu0 %55
    %vm57 = vcmask 523712
    %58 = vst.msk [vmem:[#allocation0] sm:$0x1] %vm57, %v56
    %s59 = scalar_lea.vmem %s0, 6
    %v60 = vld [vmem:[%s59] sm:$0x1]
    %61 = vrot.lane.b32.xlu0 %v60, 48
    %v62 = vpop.permute.xlu0 %61
    %vm63 = vcmask 458112
    %64 = vst.msk [vmem:[#allocation0] sm:$0x1] %vm63, %v62
    %s65 = scalar_lea.vmem %s0, 5
    %v66 = vld [vmem:[%s65] sm:$0x1]
    %67 = vrot.lane.b32.xlu0 %v66, 40
    %v68 = vpop.permute.xlu0 %67
    %vm69 = vcmask 392512
    %70 = vst.msk [vmem:[#allocation0] sm:$0x1] %vm69, %v68
    %s71 = scalar_lea.vmem %s0, 4
    %v72 = vld [vmem:[%s71] sm:$0x1]
    %73 = vrot.lane.b32.xlu0 %v72, 32
    %v74 = vpop.permute.xlu0 %73
    %vm75 = vcmask 326912
    %76 = vst.msk [vmem:[#allocation0] sm:$0x1] %vm75, %v74
    %s77 = scalar_lea.vmem %s0, 3
    %v78 = vld [vmem:[%s77] sm:$0x1]
    %79 = vrot.lane.b32.xlu0 %v78, 24
    %v80 = vpop.permute.xlu0 %79
    %vm81 = vcmask 261312
    %82 = vst.msk [vmem:[#allocation0] sm:$0x1] %vm81, %v80
    %s83 = scalar_lea.vmem %s0, 2
    %v84 = vld [vmem:[%s83] sm:$0x1]
    %85 = vrot.lane.b32.xlu0 %v84, 16
    %v86 = vpop.permute.xlu0 %85
    %vm87 = vcmask 195712
    %88 = vst.msk [vmem:[#allocation0] sm:$0x1] %vm87, %v86
    %s89 = scalar_lea.vmem %s0, 1
    %v90 = vld [vmem:[%s89] sm:$0x1]
    %91 = vrot.lane.b32.xlu0 %v90, 8
    %v92 = vpop.permute.xlu0 %91
    %vm93 = vcmask 130112
    %94 = vst.msk [vmem:[#allocation0] sm:$0x1] %vm93, %v92
    %s96 = sshllo.u32 0, 1
    %v98 = vld [vmem:[#allocation0] sm:%s96]
    %s99 = sshllo.u32 0, 1
    %100 = vst [vmem:[%s1] sm:%s99] %v98

// kernel: basic_block_forward.1
$region0: #{basic_block_forward.1}
  #allocation0 [shape = 'u32[]', space=smem, size = 0x4, offset = 0x4, fixed_abs, tag = 'smem constant byte address 0x4 - core index']
  #allocation1 [shape = 'u32[144,128]{1,0:T(1,128)}', space=vmem, size = 0x12000, scoped, tag = 'internal scratch']
  #allocation2 [shape = 'bf16[2,18,128]{2,1,0:T(8,128)(2,1)}', space=vmem, size = 0x3000, scoped, tag = 'scratch operand']
  %s0 = inlined_call_operand.vmem [shape: bf16[2,16,128], index: 0, kind: input, shape index: {}]
  %s1 = inlined_call_operand.vmem [shape: bf16[384,128], index: 1, kind: input, shape index: {}]
  %s2 = inlined_call_operand.vmem [shape: bf16[384,128], index: 2, kind: input, shape index: {}]
  %s3 = inlined_call_operand.vmem [shape: f32[1,128], index: 3, kind: input, shape index: {}]
  %s4 = inlined_call_operand.vmem [shape: f32[1,128], index: 4, kind: input, shape index: {}]
  %s5 = inlined_call_operand.vmem [shape: f32[2,16,128], index: 5, kind: output, shape index: {}]
  %s6 = sld [smem:[#allocation0]]
  $region30: #{basic_block_forward.1} parent=0
    _
  %s8 = ssub.s32 1, %s6
  %s9 = scalar_select 0, %s8, %s6
  // Predicated region
  $region2: #{basic_block_forward.1} parent=0 // pred_check
    _
  $region3: #{basic_block_forward.1} parent=0 // pred_check_branch
    %11 = sbr.rel (0) target = $region5
  $region4: #{basic_block_forward.1} parent=0 // pred_region
    _
  $region5: #{basic_block_forward.1} parent=0 // pred_fallthru
    _
  // Predicated region
  $region6: #{basic_block_forward.1} parent=0 // pred_check
    _
  $region7: #{basic_block_forward.1} parent=0 // pred_check_branch
    %13 = sbr.rel (0) target = $region9
  $region8: #{basic_block_forward.1} parent=0 // pred_region
    _
  $region9: #{basic_block_forward.1} parent=0 // pred_fallthru
    _
  // Predicated region
  $region10: #{basic_block_forward.1} parent=0 // pred_check
    _
  $region11: #{basic_block_forward.1} parent=0 // pred_check_branch
    %15 = sbr.rel (0) target = $region13
  $region12: #{basic_block_forward.1} parent=0 // pred_region
    _
  $region13: #{basic_block_forward.1} parent=0 // pred_fallthru
    _
  // Predicated region
  $region14: #{basic_block_forward.1} parent=0 // pred_check
    _
  $region15: #{basic_block_forward.1} parent=0 // pred_check_branch
    %17 = sbr.rel (0) target = $region17
  $region16: #{basic_block_forward.1} parent=0 // pred_region
    _
  $region17: #{basic_block_forward.1} parent=0 // pred_fallthru
    _
  // Predicated region
  $region18: #{basic_block_forward.1} parent=0 // pred_check
    _
  $region19: #{basic_block_forward.1} parent=0 // pred_check_branch
    %19 = sbr.rel (0) target = $region21
  $region20: #{basic_block_forward.1} parent=0 // pred_region
    _
  $region21: #{basic_block_forward.1} parent=0 // pred_fallthru
    _
  %vm21 = vcmask 1040384
  %vm22 = vsmask.f32 256
  %vm23 = vmand %vm21, %vm22
  %v24 = vld [vmem:[#allocation2] sm:$0x1]
  %v25 = vsel %vm23, 0, %v24
  %26 = vst [vmem:[#allocation2] sm:$0x1] %v25
  %v27 = vld [vmem:[#allocation2 + $0xc] sm:$0x1]
  %v28 = vsel %vm23, 0, %v27
  %29 = vst [vmem:[#allocation2 + $0xc] sm:$0x1] %v28
  %vm30 = vsmask.f32 7938
  %vm31 = vmand %vm21, %vm30
  %v32 = vld [vmem:[#allocation2 + $0x8] sm:$0x1]
  %v33 = vsel %vm31, 0, %v32
  %34 = vst [vmem:[#allocation2 + $0x8] sm:$0x1] %v33
  %v35 = vld [vmem:[#allocation2 + $0x14] sm:$0x1]
  %v36 = vsel %vm31, 0, %v35
  %37 = vst [vmem:[#allocation2 + $0x14] sm:$0x1] %v36
  %v38 = vld [vmem:[%s0] sm:$0xf]
  %v39 = vld [vmem:[%s0 + $0x4] sm:$0xf]
  %v40 = vld [vmem:[%s0 + $0x8] sm:$0xf]
  %v41 = vld [vmem:[%s0 + $0xc] sm:$0xf]
  %vm42 = vsmask.f32 4368
  %vm43 = vmor %vm22, %vm42
  %v45 = vshrl.u32 %v38, 16
  %v47 = vrot.slane %v45, 7
  %v48 = vshll.u32 %v38, 16
  %v50 = vor.u32 %v47, %v48
  %v51 = vrot.slane %v47, 4
  %v53 = vshrl.u32 %v39, 16
  %v55 = vrot.slane %v53, 7
  %v56 = vshll.u32 %v39, 16
  %v58 = vor.u32 %v55, %v56
  %v59 = vsel %vm43, %v51, %v58
  %v60 = vrot.slane %v55, 4
  %v62 = vshrl.u32 %v40, 16
  %v64 = vrot.slane %v62, 7
  %v65 = vshll.u32 %v40, 16
  %v67 = vor.u32 %v64, %v65
  %v68 = vrot.slane %v64, 4
  %v70 = vshrl.u32 %v41, 16
  %v72 = vrot.slane %v70, 7
  %v73 = vshll.u32 %v41, 16
  %v75 = vor.u32 %v72, %v73
  %v76 = vsel %vm43, %v68, %v75
  %v77 = vrot.slane %v72, 4
  %vm84 = vcmask 1043456
  %vm85 = vmand %vm84, %vm30
  %v86 = vld [vmem:[#allocation2] sm:$0xf]
  %v87 = vsel %vm85, %v50, %v86
  %88 = vst [vmem:[#allocation2] sm:$0xf] %v87
  %89 = vst [vmem:[#allocation2 + $0x4] sm:$0xf] %v59
  %v90 = vld [vmem:[#allocation2 + $0x8] sm:$0x1]
  %v91 = vsel %vm23, %v60, %v90
  %92 = vst [vmem:[#allocation2 + $0x8] sm:$0x1] %v91
  %v93 = vld [vmem:[#allocation2 + $0xc] sm:$0xf]
  %v94 = vsel %vm85, %v67, %v93
  %95 = vst [vmem:[#allocation2 + $0xc] sm:$0xf] %v94
  %96 = vst [vmem:[#allocation2 + $0x10] sm:$0xf] %v76
  %v97 = vld [vmem:[#allocation2 + $0x14] sm:$0x1]
  %v98 = vsel %vm23, %v77, %v97
  %99 = vst [vmem:[#allocation2 + $0x14] sm:$0x1] %v98
  %v100 = vld [vmem:[#allocation2] sm:$0xf]
  %v101 = vld [vmem:[#allocation2 + $0x4] sm:$0xf]
  %v102 = vld [vmem:[#allocation2 + $0xc] sm:$0xf]
  %v103 = vld [vmem:[#allocation2 + $0x10] sm:$0xf]
  %v104 = vld [vmem:[%s1] sm:$0xf]
  %v105 = vld [vmem:[%s1 + $0x4] sm:$0xf]
  %v106 = vld [vmem:[%s1 + $0x8] sm:$0xf]
  %v107 = vld [vmem:[%s1 + $0xc] sm:$0xf]
  %v108 = vld [vmem:[%s1 + $0x10] sm:$0xf]
  %v109 = vld [vmem:[%s1 + $0x14] sm:$0xf]
  %v110 = vld [vmem:[%s1 + $0x18] sm:$0xf]
  %v111 = vld [vmem:[%s1 + $0x1c] sm:$0xf]
  %v112 = vld [vmem:[%s1 + $0x20] sm:$0xf]
  %v113 = vld [vmem:[%s1 + $0x24] sm:$0xf]
  %v114 = vld [vmem:[%s1 + $0x28] sm:$0xf]
  %v115 = vld [vmem:[%s1 + $0x2c] sm:$0xf]
  %v116 = vld [vmem:[%s1 + $0x30] sm:$0xf]
  %v117 = vld [vmem:[%s1 + $0x34] sm:$0xf]
  %v118 = vld [vmem:[%s1 + $0x38] sm:$0xf]
  %v119 = vld [vmem:[%s1 + $0x3c] sm:$0xf]
  %v120 = vld [vmem:[#allocation2 + $0x8] sm:$0x1]
  %v121 = vld [vmem:[#allocation2 + $0x14] sm:$0x1]
  %vm122 = vsmask.f32 3328
  %vm123 = vsmask.f32 7440
  %vm124 = vmor %vm122, %vm123
  %v126 = vshrl.u32 %v100, 16
  %v128 = vrot.slane %v126, 4
  %v129 = vshll.u32 %v100, 16
  %v131 = vrot.slane %v129, 5
  %v132 = vor.u32 %v128, %v131
  %v133 = vrot.slane %v132, 4
  %v135 = vshll.u32 %v101, 16
  %v137 = vrot.slane %v135, 5
  %v138 = vsel %vm124, %v133, %v137
  %v139 = vshrl.u32 %v101, 16
  %v141 = vrot.slane %v139, 4
  %v142 = vor.u32 %v141, %v137
  %v143 = vrot.slane %v142, 4
  %v145 = vshll.u32 %v120, 16
  %v147 = vrot.slane %v145, 5
  %v148 = vsel %vm124, %v143, %v147
  %v150 = vshrl.u32 %v102, 16
  %v152 = vrot.slane %v150, 4
  %v153 = vshll.u32 %v102, 16
  %v155 = vrot.slane %v153, 5
  %v156 = vor.u32 %v152, %v155
  %v157 = vrot.slane %v156, 4
  %v159 = vshll.u32 %v103, 16
  %v161 = vrot.slane %v159, 5
  %v162 = vsel %vm124, %v157, %v161
  %v163 = vshrl.u32 %v103, 16
  %v165 = vrot.slane %v163, 4
  %v166 = vor.u32 %v165, %v161
  %v167 = vrot.slane %v166, 4
  %v169 = vshll.u32 %v121, 16
  %v171 = vrot.slane %v169, 5
  %v172 = vsel %vm124, %v167, %v171
  %v173 = vld [vmem:[%s1 + $0x40] sm:$0xf]
  %v174 = vld [vmem:[%s1 + $0x44] sm:$0xf]
  %v175 = vld [vmem:[%s1 + $0x48] sm:$0xf]
  %v176 = vld [vmem:[%s1 + $0x4c] sm:$0xf]
  %v177 = vld [vmem:[%s1 + $0x50] sm:$0xf]
  %v178 = vld [vmem:[%s1 + $0x54] sm:$0xf]
  %v179 = vld [vmem:[%s1 + $0x58] sm:$0xf]
  %v180 = vld [vmem:[%s1 + $0x5c] sm:$0xf]
  %v181 = vld [vmem:[%s1 + $0x60] sm:$0xf]
  %v182 = vld [vmem:[%s1 + $0x64] sm:$0xf]
  %v183 = vld [vmem:[%s1 + $0x68] sm:$0xf]
  %v184 = vld [vmem:[%s1 + $0x6c] sm:$0xf]
  %v185 = vld [vmem:[%s1 + $0x70] sm:$0xf]
  %v186 = vld [vmem:[%s1 + $0x74] sm:$0xf]
  %v187 = vld [vmem:[%s1 + $0x78] sm:$0xf]
  %v188 = vld [vmem:[%s1 + $0x7c] sm:$0xf]
  %v189 = vunpack.c.l.b16 %v138
  %v190 = vunpack.c.l.b16 %v148
  %v191 = vunpack.c.l.b16 %v162
  %v192 = vunpack.c.l.b16 %v172
  %v193 = vpack.c.b16 %v190, %v189
  %v194 = vpack.c.b16 %v192, %v191
  %v213 = vunpack.c.l.b16 %v173
  %v214 = vunpack.c.l.b16 %v174
  %v215 = vunpack.c.l.b16 %v175
  %v216 = vunpack.c.l.b16 %v176
  %v217 = vunpack.c.l.b16 %v177
  %v218 = vunpack.c.l.b16 %v178
  %v219 = vunpack.c.l.b16 %v179
  %v220 = vunpack.c.l.b16 %v180
  %v221 = vunpack.c.l.b16 %v181
  %v222 = vunpack.c.l.b16 %v182
  %v223 = vunpack.c.l.b16 %v183
  %v224 = vunpack.c.l.b16 %v184
  %v225 = vunpack.c.l.b16 %v185
  %v226 = vunpack.c.l.b16 %v186
  %v227 = vunpack.c.l.b16 %v187
  %v228 = vunpack.c.l.b16 %v188
  %v229 = vpack.c.b16 %v214, %v213
  %v230 = vpack.c.b16 %v216, %v215
  %v231 = vpack.c.b16 %v218, %v217
  %v232 = vpack.c.b16 %v220, %v219
  %v233 = vpack.c.b16 %v222, %v221
  %v234 = vpack.c.b16 %v224, %v223
  %v235 = vpack.c.b16 %v226, %v225
  %v236 = vpack.c.b16 %v228, %v227
  %245 = vmatprep.subr.bf16.mxu0 0
  %246 = vmatpush1.bf16.msra.mxu0 %v229
  %247 = vmatprep.subr.bf16.mxu0 0
  %248 = vmatpush1.bf16.msra.mxu0 %v230
  %249 = vmatprep.subr.bf16.mxu0 0
  %250 = vmatpush1.bf16.msra.mxu0 %v231
  %251 = vmatprep.subr.bf16.mxu0 0
  %252 = vmatpush1.bf16.msra.mxu0 %v232
  %253 = vmatprep.subr.bf16.mxu0 0
  %254 = vmatpush1.bf16.msra.mxu0 %v233
  %255 = vmatprep.subr.bf16.mxu0 0
  %256 = vmatpush1.bf16.msra.mxu0 %v234
  %257 = vmatprep.subr.bf16.mxu0 0
  %258 = vmatpush1.bf16.msra.mxu0 %v235
  %259 = vmatprep.subr.bf16.mxu0 0
  %260 = vmatpush1.bf16.msra.mxu0 %v236
  %261 = vmatprep.subr.bf16.mxu0 0
  %262 = vmatpush1.bf16.msra.mxu0 0
  %263 = vmatprep.subr.bf16.mxu0 0
  %264 = vmatpush1.bf16.msra.mxu0 0
  %265 = vmatprep.subr.bf16.mxu0 0
  %266 = vmatpush1.bf16.msra.mxu0 0
  %267 = vmatprep.subr.bf16.mxu0 0
  %268 = vmatpush1.bf16.msra.mxu0 0
  %269 = vmatprep.subr.bf16.mxu0 0
  %270 = vmatpush1.bf16.msra.mxu0 0
  %271 = vmatprep.subr.bf16.mxu0 0
  %272 = vmatpush1.bf16.msra.mxu0 0
  %273 = vmatprep.subr.bf16.mxu0 0
  %274 = vmatpush1.bf16.msra.mxu0 0
  %275 = vmatprep.subr.bf16.mxu0 0
  %276 = vmatpush1.bf16.msra.mxu0 0
  %277 = vmatprep.mubr.bf16.mxu0 0
  %278 = vmatmul.mubr.bf16.gmra.mrb[0].mxu0 %v193
  %v279 = vpop.f32.mrb[0].mxu0
  %v280 = vadd.f32 0.0, %v279
  %v281 = vpop.f32.mrb[0].mxu0
  %v282 = vpop.f32.mrb[0].mxu0
  %v283 = vadd.f32 0.0, %v282
  %v284 = vpop.f32.mrb[0].mxu0
  %285 = vmatprep.mubr.bf16.mxu0 0
  %286 = vmatmul.mubr.bf16.gmra.mrb[0].mxu0 %v194
  %v287 = vpop.f32.mrb[0].mxu0
  %v288 = vadd.f32 0.0, %v287
  %v289 = vpop.f32.mrb[0].mxu0
  %v290 = vpop.f32.mrb[0].mxu0
  %v291 = vadd.f32 0.0, %v290
  %v292 = vpop.f32.mrb[0].mxu0
  %293 = vdwg.mxu0
  %v298 = vunpack.c.l.b16 %v100
  %v299 = vunpack.c.l.b16 %v101
  %v300 = vunpack.c.l.b16 %v102
  %v301 = vunpack.c.l.b16 %v103
  %v302 = vpack.c.b16 %v299, %v298
  %v303 = vpack.c.b16 %v301, %v300
  %v322 = vunpack.c.l.b16 %v104
  %v323 = vunpack.c.l.b16 %v105
  %v324 = vunpack.c.l.b16 %v106
  %v325 = vunpack.c.l.b16 %v107
  %v326 = vunpack.c.l.b16 %v108
  %v327 = vunpack.c.l.b16 %v109
  %v328 = vunpack.c.l.b16 %v110
  %v329 = vunpack.c.l.b16 %v111
  %v330 = vunpack.c.l.b16 %v112
  %v331 = vunpack.c.l.b16 %v113
  %v332 = vunpack.c.l.b16 %v114
  %v333 = vunpack.c.l.b16 %v115
  %v334 = vunpack.c.l.b16 %v116
  %v335 = vunpack.c.l.b16 %v117
  %v336 = vunpack.c.l.b16 %v118
  %v337 = vunpack.c.l.b16 %v119
  %v338 = vpack.c.b16 %v323, %v322
  %v339 = vpack.c.b16 %v325, %v324
  %v340 = vpack.c.b16 %v327, %v326
  %v341 = vpack.c.b16 %v329, %v328
  %v342 = vpack.c.b16 %v331, %v330
  %v343 = vpack.c.b16 %v333, %v332
  %v344 = vpack.c.b16 %v335, %v334
  %v345 = vpack.c.b16 %v337, %v336
  %354 = vmatprep.subr.bf16.mxu0 0
  %355 = vmatpush1.bf16.msra.mxu0 %v338
  %356 = vmatprep.subr.bf16.mxu0 0
  %357 = vmatpush1.bf16.msra.mxu0 %v339
  %358 = vmatprep.subr.bf16.mxu0 0
  %359 = vmatpush1.bf16.msra.mxu0 %v340
  %360 = vmatprep.subr.bf16.mxu0 0
  %361 = vmatpush1.bf16.msra.mxu0 %v341
  %362 = vmatprep.subr.bf16.mxu0 0
  %363 = vmatpush1.bf16.msra.mxu0 %v342
  %364 = vmatprep.subr.bf16.mxu0 0
  %365 = vmatpush1.bf16.msra.mxu0 %v343
  %366 = vmatprep.subr.bf16.mxu0 0
  %367 = vmatpush1.bf16.msra.mxu0 %v344
  %368 = vmatprep.subr.bf16.mxu0 0
  %369 = vmatpush1.bf16.msra.mxu0 %v345
  %370 = vmatprep.subr.bf16.mxu0 0
  %371 = vmatpush1.bf16.msra.mxu0 0
  %372 = vmatprep.subr.bf16.mxu0 0
  %373 = vmatpush1.bf16.msra.mxu0 0
  %374 = vmatprep.subr.bf16.mxu0 0
  %375 = vmatpush1.bf16.msra.mxu0 0
  %376 = vmatprep.subr.bf16.mxu0 0
  %377 = vmatpush1.bf16.msra.mxu0 0
  %378 = vmatprep.subr.bf16.mxu0 0
  %379 = vmatpush1.bf16.msra.mxu0 0
  %380 = vmatprep.subr.bf16.mxu0 0
  %381 = vmatpush1.bf16.msra.mxu0 0
  %382 = vmatprep.subr.bf16.mxu0 0
  %383 = vmatpush1.bf16.msra.mxu0 0
  %384 = vmatprep.subr.bf16.mxu0 0
  %385 = vmatpush1.bf16.msra.mxu0 0
  %386 = vmatprep.mubr.bf16.mxu0 0
  %387 = vmatmul.mubr.bf16.gmra.mrb[0].mxu0 %v302
  %v388 = vpop.f32.mrb[0].mxu0
  %v389 = vadd.f32 %v280, %v388
  %v390 = vpop.f32.mrb[0].mxu0
  %v391 = vpop.f32.mrb[0].mxu0
  %v392 = vadd.f32 %v283, %v391
  %v393 = vpop.f32.mrb[0].mxu0
  %394 = vmatprep.mubr.bf16.mxu0 0
  %395 = vmatmul.mubr.bf16.gmra.mrb[0].mxu0 %v303
  %v396 = vpop.f32.mrb[0].mxu0
  %v397 = vadd.f32 %v288, %v396
  %v398 = vpop.f32.mrb[0].mxu0
  %v399 = vpop.f32.mrb[0].mxu0
  %v400 = vadd.f32 %v291, %v399
  %v401 = vpop.f32.mrb[0].mxu0
  %402 = vdwg.mxu0
  %v403 = vld [vmem:[#allocation2] sm:$0xe]
  %v404 = vld [vmem:[#allocation2 + $0xc] sm:$0xe]
  %vm409 = vcmask 1042432
  %vm410 = vcmask 1046532
  %vm411 = vmor %vm409, %vm410
  %v412 = vrot.slane %v403, 5
  %v413 = vrot.slane %v412, 4
  %v414 = vrot.slane %v101, 5
  %v415 = vsel %vm411, %v413, %v414
  %v416 = vrot.slane %v414, 4
  %v417 = vrot.slane %v120, 5
  %v418 = vsel %vm411, %v416, %v417
  %v419 = vrot.slane %v404, 5
  %v420 = vrot.slane %v419, 4
  %v421 = vrot.slane %v103, 5
  %v422 = vsel %vm411, %v420, %v421
  %v423 = vrot.slane %v421, 4
  %v424 = vrot.slane %v121, 5
  %v425 = vsel %vm411, %v423, %v424
  %v426 = vld [vmem:[%s1 + $0x80] sm:$0xf]
  %v427 = vld [vmem:[%s1 + $0x84] sm:$0xf]
  %v428 = vld [vmem:[%s1 + $0x88] sm:$0xf]
  %v429 = vld [vmem:[%s1 + $0x8c] sm:$0xf]
  %v430 = vld [vmem:[%s1 + $0x90] sm:$0xf]
  %v431 = vld [vmem:[%s1 + $0x94] sm:$0xf]
  %v432 = vld [vmem:[%s1 + $0x98] sm:$0xf]
  %v433 = vld [vmem:[%s1 + $0x9c] sm:$0xf]
  %v434 = vld [vmem:[%s1 + $0xa0] sm:$0xf]
  %v435 = vld [vmem:[%s1 + $0xa4] sm:$0xf]
  %v436 = vld [vmem:[%s1 + $0xa8] sm:$0xf]
  %v437 = vld [vmem:[%s1 + $0xac] sm:$0xf]
  %v438 = vld [vmem:[%s1 + $0xb0] sm:$0xf]
  %v439 = vld [vmem:[%s1 + $0xb4] sm:$0xf]
  %v440 = vld [vmem:[%s1 + $0xb8] sm:$0xf]
  %v441 = vld [vmem:[%s1 + $0xbc] sm:$0xf]
  %v442 = vunpack.c.l.b16 %v415
  %v443 = vunpack.c.l.b16 %v418
  %v444 = vunpack.c.l.b16 %v422
  %v445 = vunpack.c.l.b16 %v425
  %v446 = vpack.c.b16 %v443, %v442
  %v447 = vpack.c.b16 %v445, %v444
  %v466 = vunpack.c.l.b16 %v426
  %v467 = vunpack.c.l.b16 %v427
  %v468 = vunpack.c.l.b16 %v428
  %v469 = vunpack.c.l.b16 %v429
  %v470 = vunpack.c.l.b16 %v430
  %v471 = vunpack.c.l.b16 %v431
  %v472 = vunpack.c.l.b16 %v432
  %v473 = vunpack.c.l.b16 %v433
  %v474 = vunpack.c.l.b16 %v434
  %v475 = vunpack.c.l.b16 %v435
  %v476 = vunpack.c.l.b16 %v436
  %v477 = vunpack.c.l.b16 %v437
  %v478 = vunpack.c.l.b16 %v438
  %v479 = vunpack.c.l.b16 %v439
  %v480 = vunpack.c.l.b16 %v440
  %v481 = vunpack.c.l.b16 %v441
  %v482 = vpack.c.b16 %v467, %v466
  %v483 = vpack.c.b16 %v469, %v468
  %v484 = vpack.c.b16 %v471, %v470
  %v485 = vpack.c.b16 %v473, %v472
  %v486 = vpack.c.b16 %v475, %v474
  %v487 = vpack.c.b16 %v477, %v476
  %v488 = vpack.c.b16 %v479, %v478
  %v489 = vpack.c.b16 %v481, %v480
  %498 = vmatprep.subr.bf16.mxu0 0
  %499 = vmatpush1.bf16.msra.mxu0 %v482
  %500 = vmatprep.subr.bf16.mxu0 0
  %501 = vmatpush1.bf16.msra.mxu0 %v483
  %502 = vmatprep.subr.bf16.mxu0 0
  %503 = vmatpush1.bf16.msra.mxu0 %v484
  %504 = vmatprep.subr.bf16.mxu0 0
  %505 = vmatpush1.bf16.msra.mxu0 %v485
  %506 = vmatprep.subr.bf16.mxu0 0
  %507 = vmatpush1.bf16.msra.mxu0 %v486
  %508 = vmatprep.subr.bf16.mxu0 0
  %509 = vmatpush1.bf16.msra.mxu0 %v487
  %510 = vmatprep.subr.bf16.mxu0 0
  %511 = vmatpush1.bf16.msra.mxu0 %v488
  %512 = vmatprep.subr.bf16.mxu0 0
  %513 = vmatpush1.bf16.msra.mxu0 %v489
  %514 = vmatprep.subr.bf16.mxu0 0
  %515 = vmatpush1.bf16.msra.mxu0 0
  %516 = vmatprep.subr.bf16.mxu0 0
  %517 = vmatpush1.bf16.msra.mxu0 0
  %518 = vmatprep.subr.bf16.mxu0 0
  %519 = vmatpush1.bf16.msra.mxu0 0
  %520 = vmatprep.subr.bf16.mxu0 0
  %521 = vmatpush1.bf16.msra.mxu0 0
  %522 = vmatprep.subr.bf16.mxu0 0
  %523 = vmatpush1.bf16.msra.mxu0 0
  %524 = vmatprep.subr.bf16.mxu0 0
  %525 = vmatpush1.bf16.msra.mxu0 0
  %526 = vmatprep.subr.bf16.mxu0 0
  %527 = vmatpush1.bf16.msra.mxu0 0
  %528 = vmatprep.subr.bf16.mxu0 0
  %529 = vmatpush1.bf16.msra.mxu0 0
  %530 = vmatprep.mubr.bf16.mxu0 0
  %531 = vmatmul.mubr.bf16.gmra.mrb[0].mxu0 %v446
  %v532 = vpop.f32.mrb[0].mxu0
  %v533 = vadd.f32 0.0, %v532
  %v534 = vpop.f32.mrb[0].mxu0
  %v535 = vpop.f32.mrb[0].mxu0
  %v536 = vadd.f32 0.0, %v535
  %v537 = vpop.f32.mrb[0].mxu0
  %538 = vmatprep.mubr.bf16.mxu0 0
  %539 = vmatmul.mubr.bf16.gmra.mrb[0].mxu0 %v447
  %v540 = vpop.f32.mrb[0].mxu0
  %v541 = vadd.f32 0.0, %v540
  %v542 = vpop.f32.mrb[0].mxu0
  %v543 = vpop.f32.mrb[0].mxu0
  %v544 = vadd.f32 0.0, %v543
  %v545 = vpop.f32.mrb[0].mxu0
  %546 = vdwg.mxu0
  %v547 = vadd.f32 %v389, %v533
  %v548 = vadd.f32 %v392, %v536
  %v549 = vadd.f32 %v397, %v541
  %v550 = vadd.f32 %v400, %v544
  %v551 = vld [vmem:[%s3] sm:$0x1]
  %v553 = vlaneseq
  %v554 = vshrl.u32 %v553, 7
  %v555 = vsub.s32 0, %v554
  %v556 = vrot.slane %v551, %v555
  %v558 = vadd.f32 %v547, %v556
  %v559 = vadd.f32 %v548, %v556
  %v560 = vadd.f32 %v549, %v556
  %v561 = vadd.f32 %v550, %v556
  %v562 = vmax.f32 %v558, 0.0
  %v563 = vmax.f32 %v559, 0.0
  %v564 = vmax.f32 %v560, 0.0
  %v565 = vmax.f32 %v561, 0.0
  %v566 = vpack.c.bf16 %v563, %v562
  %v567 = vpack.c.bf16 %v565, %v564
  %v570 = vunpack.c.l.b16 %v566
  %v571 = vunpack.c.h.b16 %v566
  %v572 = vunpack.c.l.b16 %v567
  %v573 = vunpack.c.h.b16 %v567
  %v574 = vpack.c.b16 %v570, %v570
  %v575 = vpack.c.b16 %v571, %v571
  %v576 = vpack.c.b16 %v572, %v572
  %v577 = vpack.c.b16 %v573, %v573
  %v579 = vshrl.u32 %v574, 16
  %v581 = vrot.slane %v579, 7
  %v582 = vshll.u32 %v574, 16
  %v584 = vor.u32 %v581, %v582
  %v585 = vrot.slane %v581, 4
  %v587 = vshrl.u32 %v575, 16
  %v589 = vrot.slane %v587, 7
  %v590 = vshll.u32 %v575, 16
  %v592 = vor.u32 %v589, %v590
  %v593 = vsel %vm43, %v585, %v592
  %v594 = vrot.slane %v589, 4
  %v596 = vshrl.u32 %v576, 16
  %v598 = vrot.slane %v596, 7
  %v599 = vshll.u32 %v576, 16
  %v601 = vor.u32 %v598, %v599
  %v602 = vrot.slane %v598, 4
  %v604 = vshrl.u32 %v577, 16
  %v606 = vrot.slane %v604, 7
  %v607 = vshll.u32 %v577, 16
  %v609 = vor.u32 %v606, %v607
  %v610 = vsel %vm43, %v602, %v609
  %v611 = vrot.slane %v606, 4
  %v618 = vsel %vm85, %v584, %v100
  %619 = vst [vmem:[#allocation2] sm:$0xf] %v618
  %620 = vst [vmem:[#allocation2 + $0x4] sm:$0xf] %v593
  %v621 = vld [vmem:[#allocation2 + $0x8] sm:$0x1]
  %v622 = vsel %vm23, %v594, %v621
  %623 = vst [vmem:[#allocation2 + $0x8] sm:$0x1] %v622
  %v624 = vld [vmem:[#allocation2 + $0xc] sm:$0xf]
  %v625 = vsel %vm85, %v601, %v624
  %626 = vst [vmem:[#allocation2 + $0xc] sm:$0xf] %v625
  %627 = vst [vmem:[#allocation2 + $0x10] sm:$0xf] %v610
  %v628 = vld [vmem:[#allocation2 + $0x14] sm:$0x1]
  %v629 = vsel %vm23, %v611, %v628
  %630 = vst [vmem:[#allocation2 + $0x14] sm:$0x1] %v629
  %v631 = vld [vmem:[%s0] sm:$0xf]
  %v632 = vld [vmem:[%s0 + $0x4] sm:$0xf]
  %v633 = vld [vmem:[%s0 + $0x8] sm:$0xf]
  %v634 = vld [vmem:[%s0 + $0xc] sm:$0xf]
  %v635 = vunpack.c.l.bf16 %v631
  %v636 = vunpack.c.l.bf16 %v632
  %v637 = vunpack.c.l.bf16 %v633
  %v638 = vunpack.c.l.bf16 %v634
  %v639 = vld [vmem:[#allocation2] sm:$0xf]
  %v640 = vld [vmem:[#allocation2 + $0x4] sm:$0xf]
  %v641 = vld [vmem:[#allocation2 + $0xc] sm:$0xf]
  %v642 = vld [vmem:[#allocation2 + $0x10] sm:$0xf]
  %v643 = vld [vmem:[%s2] sm:$0xf]
  %v644 = vld [vmem:[%s2 + $0x4] sm:$0xf]
  %v645 = vld [vmem:[%s2 + $0x8] sm:$0xf]
  %v646 = vld [vmem:[%s2 + $0xc] sm:$0xf]
  %v647 = vld [vmem:[%s2 + $0x10] sm:$0xf]
  %v648 = vld [vmem:[%s2 + $0x14] sm:$0xf]
  %v649 = vld [vmem:[%s2 + $0x18] sm:$0xf]
  %v650 = vld [vmem:[%s2 + $0x1c] sm:$0xf]
  %v651 = vld [vmem:[%s2 + $0x20] sm:$0xf]
  %v652 = vld [vmem:[%s2 + $0x24] sm:$0xf]
  %v653 = vld [vmem:[%s2 + $0x28] sm:$0xf]
  %v654 = vld [vmem:[%s2 + $0x2c] sm:$0xf]
  %v655 = vld [vmem:[%s2 + $0x30] sm:$0xf]
  %v656 = vld [vmem:[%s2 + $0x34] sm:$0xf]
  %v657 = vld [vmem:[%s2 + $0x38] sm:$0xf]
  %v658 = vld [vmem:[%s2 + $0x3c] sm:$0xf]
  %v659 = vld [vmem:[#allocation2 + $0x8] sm:$0x1]
  %v660 = vld [vmem:[#allocation2 + $0x14] sm:$0x1]
  %v662 = vshrl.u32 %v639, 16
  %v664 = vrot.slane %v662, 4
  %v665 = vshll.u32 %v639, 16
  %v667 = vrot.slane %v665, 5
  %v668 = vor.u32 %v664, %v667
  %v669 = vrot.slane %v668, 4
  %v671 = vshll.u32 %v640, 16
  %v673 = vrot.slane %v671, 5
  %v674 = vsel %vm124, %v669, %v673
  %v675 = vshrl.u32 %v640, 16
  %v677 = vrot.slane %v675, 4
  %v678 = vor.u32 %v677, %v673
  %v679 = vrot.slane %v678, 4
  %v681 = vshll.u32 %v659, 16
  %v683 = vrot.slane %v681, 5
  %v684 = vsel %vm124, %v679, %v683
  %v686 = vshrl.u32 %v641, 16
  %v688 = vrot.slane %v686, 4
  %v689 = vshll.u32 %v641, 16
  %v691 = vrot.slane %v689, 5
  %v692 = vor.u32 %v688, %v691
  %v693 = vrot.slane %v692, 4
  %v695 = vshll.u32 %v642, 16
  %v697 = vrot.slane %v695, 5
  %v698 = vsel %vm124, %v693, %v697
  %v699 = vshrl.u32 %v642, 16
  %v701 = vrot.slane %v699, 4
  %v702 = vor.u32 %v701, %v697
  %v703 = vrot.slane %v702, 4
  %v705 = vshll.u32 %v660, 16
  %v707 = vrot.slane %v705, 5
  %v708 = vsel %vm124, %v703, %v707
  %v709 = vld [vmem:[%s2 + $0x40] sm:$0xf]
  %v710 = vld [vmem:[%s2 + $0x44] sm:$0xf]
  %v711 = vld [vmem:[%s2 + $0x48] sm:$0xf]
  %v712 = vld [vmem:[%s2 + $0x4c] sm:$0xf]
  %v713 = vld [vmem:[%s2 + $0x50] sm:$0xf]
  %v714 = vld [vmem:[%s2 + $0x54] sm:$0xf]
  %v715 = vld [vmem:[%s2 + $0x58] sm:$0xf]
  %v716 = vld [vmem:[%s2 + $0x5c] sm:$0xf]
  %v717 = vld [vmem:[%s2 + $0x60] sm:$0xf]
  %v718 = vld [vmem:[%s2 + $0x64] sm:$0xf]
  %v719 = vld [vmem:[%s2 + $0x68] sm:$0xf]
  %v720 = vld [vmem:[%s2 + $0x6c] sm:$0xf]
  %v721 = vld [vmem:[%s2 + $0x70] sm:$0xf]
  %v722 = vld [vmem:[%s2 + $0x74] sm:$0xf]
  %v723 = vld [vmem:[%s2 + $0x78] sm:$0xf]
  %v724 = vld [vmem:[%s2 + $0x7c] sm:$0xf]
  %v725 = vunpack.c.l.b16 %v674
  %v726 = vunpack.c.l.b16 %v684
  %v727 = vunpack.c.l.b16 %v698
  %v728 = vunpack.c.l.b16 %v708
  %v729 = vpack.c.b16 %v726, %v725
  %v730 = vpack.c.b16 %v728, %v727
  %v749 = vunpack.c.l.b16 %v709
  %v750 = vunpack.c.l.b16 %v710
  %v751 = vunpack.c.l.b16 %v711
  %v752 = vunpack.c.l.b16 %v712
  %v753 = vunpack.c.l.b16 %v713
  %v754 = vunpack.c.l.b16 %v714
  %v755 = vunpack.c.l.b16 %v715
  %v756 = vunpack.c.l.b16 %v716
  %v757 = vunpack.c.l.b16 %v717
  %v758 = vunpack.c.l.b16 %v718
  %v759 = vunpack.c.l.b16 %v719
  %v760 = vunpack.c.l.b16 %v720
  %v761 = vunpack.c.l.b16 %v721
  %v762 = vunpack.c.l.b16 %v722
  %v763 = vunpack.c.l.b16 %v723
  %v764 = vunpack.c.l.b16 %v724
  %v765 = vpack.c.b16 %v750, %v749
  %v766 = vpack.c.b16 %v752, %v751
  %v767 = vpack.c.b16 %v754, %v753
  %v768 = vpack.c.b16 %v756, %v755
  %v769 = vpack.c.b16 %v758, %v757
  %v770 = vpack.c.b16 %v760, %v759
  %v771 = vpack.c.b16 %v762, %v761
  %v772 = vpack.c.b16 %v764, %v763
  %781 = vmatprep.subr.bf16.mxu0 0
  %782 = vmatpush1.bf16.msra.mxu0 %v765
  %783 = vmatprep.subr.bf16.mxu0 0
  %784 = vmatpush1.bf16.msra.mxu0 %v766
  %785 = vmatprep.subr.bf16.mxu0 0
  %786 = vmatpush1.bf16.msra.mxu0 %v767
  %787 = vmatprep.subr.bf16.mxu0 0
  %788 = vmatpush1.bf16.msra.mxu0 %v768
  %789 = vmatprep.subr.bf16.mxu0 0
  %790 = vmatpush1.bf16.msra.mxu0 %v769
  %791 = vmatprep.subr.bf16.mxu0 0
  %792 = vmatpush1.bf16.msra.mxu0 %v770
  %793 = vmatprep.subr.bf16.mxu0 0
  %794 = vmatpush1.bf16.msra.mxu0 %v771
  %795 = vmatprep.subr.bf16.mxu0 0
  %796 = vmatpush1.bf16.msra.mxu0 %v772
  %797 = vmatprep.subr.bf16.mxu0 0
  %798 = vmatpush1.bf16.msra.mxu0 0
  %799 = vmatprep.subr.bf16.mxu0 0
  %800 = vmatpush1.bf16.msra.mxu0 0
  %801 = vmatprep.subr.bf16.mxu0 0
  %802 = vmatpush1.bf16.msra.mxu0 0
  %803 = vmatprep.subr.bf16.mxu0 0
  %804 = vmatpush1.bf16.msra.mxu0 0
  %805 = vmatprep.subr.bf16.mxu0 0
  %806 = vmatpush1.bf16.msra.mxu0 0
  %807 = vmatprep.subr.bf16.mxu0 0
  %808 = vmatpush1.bf16.msra.mxu0 0
  %809 = vmatprep.subr.bf16.mxu0 0
  %810 = vmatpush1.bf16.msra.mxu0 0
  %811 = vmatprep.subr.bf16.mxu0 0
  %812 = vmatpush1.bf16.msra.mxu0 0
  %813 = vmatprep.mubr.bf16.mxu0 0
  %814 = vmatmul.mubr.bf16.gmra.mrb[0].mxu0 %v729
  %v815 = vpop.f32.mrb[0].mxu0
  %v816 = vadd.f32 0.0, %v815
  %v817 = vpop.f32.mrb[0].mxu0
  %v818 = vpop.f32.mrb[0].mxu0
  %v819 = vadd.f32 0.0, %v818
  %v820 = vpop.f32.mrb[0].mxu0
  %821 = vmatprep.mubr.bf16.mxu0 0
  %822 = vmatmul.mubr.bf16.gmra.mrb[0].mxu0 %v730
  %v823 = vpop.f32.mrb[0].mxu0
  %v824 = vadd.f32 0.0, %v823
  %v825 = vpop.f32.mrb[0].mxu0
  %v826 = vpop.f32.mrb[0].mxu0
  %v827 = vadd.f32 0.0, %v826
  %v828 = vpop.f32.mrb[0].mxu0
  %829 = vdwg.mxu0
  %v834 = vunpack.c.l.b16 %v639
  %v835 = vunpack.c.l.b16 %v640
  %v836 = vunpack.c.l.b16 %v641
  %v837 = vunpack.c.l.b16 %v642
  %v838 = vpack.c.b16 %v835, %v834
  %v839 = vpack.c.b16 %v837, %v836
  %v858 = vunpack.c.l.b16 %v643
  %v859 = vunpack.c.l.b16 %v644
  %v860 = vunpack.c.l.b16 %v645
  %v861 = vunpack.c.l.b16 %v646
  %v862 = vunpack.c.l.b16 %v647
  %v863 = vunpack.c.l.b16 %v648
  %v864 = vunpack.c.l.b16 %v649
  %v865 = vunpack.c.l.b16 %v650
  %v866 = vunpack.c.l.b16 %v651
  %v867 = vunpack.c.l.b16 %v652
  %v868 = vunpack.c.l.b16 %v653
  %v869 = vunpack.c.l.b16 %v654
  %v870 = vunpack.c.l.b16 %v655
  %v871 = vunpack.c.l.b16 %v656
  %v872 = vunpack.c.l.b16 %v657
  %v873 = vunpack.c.l.b16 %v658
  %v874 = vpack.c.b16 %v859, %v858
  %v875 = vpack.c.b16 %v861, %v860
  %v876 = vpack.c.b16 %v863, %v862
  %v877 = vpack.c.b16 %v865, %v864
  %v878 = vpack.c.b16 %v867, %v866
  %v879 = vpack.c.b16 %v869, %v868
  %v880 = vpack.c.b16 %v871, %v870
  %v881 = vpack.c.b16 %v873, %v872
  %890 = vmatprep.subr.bf16.mxu0 0
  %891 = vmatpush1.bf16.msra.mxu0 %v874
  %892 = vmatprep.subr.bf16.mxu0 0
  %893 = vmatpush1.bf16.msra.mxu0 %v875
  %894 = vmatprep.subr.bf16.mxu0 0
  %895 = vmatpush1.bf16.msra.mxu0 %v876
  %896 = vmatprep.subr.bf16.mxu0 0
  %897 = vmatpush1.bf16.msra.mxu0 %v877
  %898 = vmatprep.subr.bf16.mxu0 0
  %899 = vmatpush1.bf16.msra.mxu0 %v878
  %900 = vmatprep.subr.bf16.mxu0 0
  %901 = vmatpush1.bf16.msra.mxu0 %v879
  %902 = vmatprep.subr.bf16.mxu0 0
  %903 = vmatpush1.bf16.msra.mxu0 %v880
  %904 = vmatprep.subr.bf16.mxu0 0
  %905 = vmatpush1.bf16.msra.mxu0 %v881
  %906 = vmatprep.subr.bf16.mxu0 0
  %907 = vmatpush1.bf16.msra.mxu0 0
  %908 = vmatprep.subr.bf16.mxu0 0
  %909 = vmatpush1.bf16.msra.mxu0 0
  %910 = vmatprep.subr.bf16.mxu0 0
  %911 = vmatpush1.bf16.msra.mxu0 0
  %912 = vmatprep.subr.bf16.mxu0 0
  %913 = vmatpush1.bf16.msra.mxu0 0
  %914 = vmatprep.subr.bf16.mxu0 0
  %915 = vmatpush1.bf16.msra.mxu0 0
  %916 = vmatprep.subr.bf16.mxu0 0
  %917 = vmatpush1.bf16.msra.mxu0 0
  %918 = vmatprep.subr.bf16.mxu0 0
  %919 = vmatpush1.bf16.msra.mxu0 0
  %920 = vmatprep.subr.bf16.mxu0 0
  %921 = vmatpush1.bf16.msra.mxu0 0
  %922 = vmatprep.mubr.bf16.mxu0 0
  %923 = vmatmul.mubr.bf16.gmra.mrb[0].mxu0 %v838
  %v924 = vpop.f32.mrb[0].mxu0
  %v925 = vadd.f32 %v816, %v924
  %v926 = vpop.f32.mrb[0].mxu0
  %v927 = vpop.f32.mrb[0].mxu0
  %v928 = vadd.f32 %v819, %v927
  %v929 = vpop.f32.mrb[0].mxu0
  %930 = vmatprep.mubr.bf16.mxu0 0
  %931 = vmatmul.mubr.bf16.gmra.mrb[0].mxu0 %v839
  %v932 = vpop.f32.mrb[0].mxu0
  %v933 = vadd.f32 %v824, %v932
  %v934 = vpop.f32.mrb[0].mxu0
  %v935 = vpop.f32.mrb[0].mxu0
  %v936 = vadd.f32 %v827, %v935
  %v937 = vpop.f32.mrb[0].mxu0
  %938 = vdwg.mxu0
  %v939 = vld [vmem:[#allocation2] sm:$0xe]
  %v940 = vld [vmem:[#allocation2 + $0xc] sm:$0xe]
  %v945 = vrot.slane %v939, 5
  %v946 = vrot.slane %v945, 4
  %v947 = vrot.slane %v640, 5
  %v948 = vsel %vm411, %v946, %v947
  %v949 = vrot.slane %v947, 4
  %v950 = vrot.slane %v659, 5
  %v951 = vsel %vm411, %v949, %v950
  %v952 = vrot.slane %v940, 5
  %v953 = vrot.slane %v952, 4
  %v954 = vrot.slane %v642, 5
  %v955 = vsel %vm411, %v953, %v954
  %v956 = vrot.slane %v954, 4
  %v957 = vrot.slane %v660, 5
  %v958 = vsel %vm411, %v956, %v957
  %v959 = vld [vmem:[%s2 + $0x80] sm:$0xf]
  %v960 = vld [vmem:[%s2 + $0x84] sm:$0xf]
  %v961 = vld [vmem:[%s2 + $0x88] sm:$0xf]
  %v962 = vld [vmem:[%s2 + $0x8c] sm:$0xf]
  %v963 = vld [vmem:[%s2 + $0x90] sm:$0xf]
  %v964 = vld [vmem:[%s2 + $0x94] sm:$0xf]
  %v965 = vld [vmem:[%s2 + $0x98] sm:$0xf]
  %v966 = vld [vmem:[%s2 + $0x9c] sm:$0xf]
  %v967 = vld [vmem:[%s2 + $0xa0] sm:$0xf]
  %v968 = vld [vmem:[%s2 + $0xa4] sm:$0xf]
  %v969 = vld [vmem:[%s2 + $0xa8] sm:$0xf]
  %v970 = vld [vmem:[%s2 + $0xac] sm:$0xf]
  %v971 = vld [vmem:[%s2 + $0xb0] sm:$0xf]
  %v972 = vld [vmem:[%s2 + $0xb4] sm:$0xf]
  %v973 = vld [vmem:[%s2 + $0xb8] sm:$0xf]
  %v974 = vld [vmem:[%s2 + $0xbc] sm:$0xf]
  %v975 = vunpack.c.l.b16 %v948
  %v976 = vunpack.c.l.b16 %v951
  %v977 = vunpack.c.l.b16 %v955
  %v978 = vunpack.c.l.b16 %v958
  %v979 = vpack.c.b16 %v976, %v975
  %v980 = vpack.c.b16 %v978, %v977
  %v999 = vunpack.c.l.b16 %v959
  %v1000 = vunpack.c.l.b16 %v960
  %v1001 = vunpack.c.l.b16 %v961
  %v1002 = vunpack.c.l.b16 %v962
  %v1003 = vunpack.c.l.b16 %v963
  %v1004 = vunpack.c.l.b16 %v964
  %v1005 = vunpack.c.l.b16 %v965
  %v1006 = vunpack.c.l.b16 %v966
  %v1007 = vunpack.c.l.b16 %v967
  %v1008 = vunpack.c.l.b16 %v968
  %v1009 = vunpack.c.l.b16 %v969
  %v1010 = vunpack.c.l.b16 %v970
  %v1011 = vunpack.c.l.b16 %v971
  %v1012 = vunpack.c.l.b16 %v972
  %v1013 = vunpack.c.l.b16 %v973
  %v1014 = vunpack.c.l.b16 %v974
  %v1015 = vpack.c.b16 %v1000, %v999
  %v1016 = vpack.c.b16 %v1002, %v1001
  %v1017 = vpack.c.b16 %v1004, %v1003
  %v1018 = vpack.c.b16 %v1006, %v1005
  %v1019 = vpack.c.b16 %v1008, %v1007
  %v1020 = vpack.c.b16 %v1010, %v1009
  %v1021 = vpack.c.b16 %v1012, %v1011
  %v1022 = vpack.c.b16 %v1014, %v1013
  %1031 = vmatprep.subr.bf16.mxu0 0
  %1032 = vmatpush1.bf16.msra.mxu0 %v1015
  %1033 = vmatprep.subr.bf16.mxu0 0
  %1034 = vmatpush1.bf16.msra.mxu0 %v1016
  %1035 = vmatprep.subr.bf16.mxu0 0
  %1036 = vmatpush1.bf16.msra.mxu0 %v1017
  %1037 = vmatprep.subr.bf16.mxu0 0
  %1038 = vmatpush1.bf16.msra.mxu0 %v1018
  %1039 = vmatprep.subr.bf16.mxu0 0
  %1040 = vmatpush1.bf16.msra.mxu0 %v1019
  %1041 = vmatprep.subr.bf16.mxu0 0
  %1042 = vmatpush1.bf16.msra.mxu0 %v1020
  %1043 = vmatprep.subr.bf16.mxu0 0
  %1044 = vmatpush1.bf16.msra.mxu0 %v1021
  %1045 = vmatprep.subr.bf16.mxu0 0
  %1046 = vmatpush1.bf16.msra.mxu0 %v1022
  %1047 = vmatprep.subr.bf16.mxu0 0
  %1048 = vmatpush1.bf16.msra.mxu0 0
  %1049 = vmatprep.subr.bf16.mxu0 0
  %1050 = vmatpush1.bf16.msra.mxu0 0
  %1051 = vmatprep.subr.bf16.mxu0 0
  %1052 = vmatpush1.bf16.msra.mxu0 0
  %1053 = vmatprep.subr.bf16.mxu0 0
  %1054 = vmatpush1.bf16.msra.mxu0 0
  %1055 = vmatprep.subr.bf16.mxu0 0
  %1056 = vmatpush1.bf16.msra.mxu0 0
  %1057 = vmatprep.subr.bf16.mxu0 0
  %1058 = vmatpush1.bf16.msra.mxu0 0
  %1059 = vmatprep.subr.bf16.mxu0 0
  %1060 = vmatpush1.bf16.msra.mxu0 0
  %1061 = vmatprep.subr.bf16.mxu0 0
  %1062 = vmatpush1.bf16.msra.mxu0 0
  %1063 = vmatprep.mubr.bf16.mxu0 0
  %1064 = vmatmul.mubr.bf16.gmra.mrb[0].mxu0 %v979
  %v1065 = vpop.f32.mrb[0].mxu0
  %v1066 = vadd.f32 0.0, %v1065
  %v1067 = vpop.f32.mrb[0].mxu0
  %v1068 = vpop.f32.mrb[0].mxu0
  %v1069 = vadd.f32 0.0, %v1068
  %v1070 = vpop.f32.mrb[0].mxu0
  %1071 = vmatprep.mubr.bf16.mxu0 0
  %1072 = vmatmul.mubr.bf16.gmra.mrb[0].mxu0 %v980
  %v1073 = vpop.f32.mrb[0].mxu0
  %v1074 = vadd.f32 0.0, %v1073
  %v1075 = vpop.f32.mrb[0].mxu0
  %v1076 = vpop.f32.mrb[0].mxu0
  %v1077 = vadd.f32 0.0, %v1076
  %v1078 = vpop.f32.mrb[0].mxu0
  %1079 = vdwg.mxu0
  %v1080 = vadd.f32 %v925, %v1066
  %v1081 = vadd.f32 %v928, %v1069
  %v1082 = vadd.f32 %v933, %v1074
  %v1083 = vadd.f32 %v936, %v1077
  %v1084 = vld [vmem:[%s4] sm:$0x1]
  %v1086 = vlaneseq
  %v1087 = vshrl.u32 %v1086, 7
  %v1088 = vsub.s32 0, %v1087
  %v1089 = vrot.slane %v1084, %v1088
  %v1091 = vadd.f32 %v1080, %v1089
  %v1092 = vadd.f32 %v1081, %v1089
  %v1093 = vadd.f32 %v1082, %v1089
  %v1094 = vadd.f32 %v1083, %v1089
  %v1095 = vadd.f32 %v1091, %v635
  %v1096 = vadd.f32 %v1092, %v636
  %v1097 = vadd.f32 %v1093, %v637
  %v1098 = vadd.f32 %v1094, %v638
  %v1099 = vmax.f32 %v1095, 0.0
  %v1100 = vmax.f32 %v1096, 0.0
  %v1101 = vmax.f32 %v1097, 0.0
  %v1102 = vmax.f32 %v1098, 0.0
  %1103 = vst [vmem:[%s5] sm:$0xff] %v1099
  %1104 = vst [vmem:[%s5 + $0x8] sm:$0xff] %v1100
  %1105 = vst [vmem:[%s5 + $0x10] sm:$0xff] %v1101
  %1106 = vst [vmem:[%s5 + $0x18] sm:$0xff] %v1102
  // Predicated region
  $region22: #{basic_block_forward.1} parent=0 // pred_check
    _
  $region23: #{basic_block_forward.1} parent=0 // pred_check_branch
    %1108 = sbr.rel (0) target = $region25
  $region24: #{basic_block_forward.1} parent=0 // pred_region
    _
  $region25: #{basic_block_forward.1} parent=0 // pred_fallthru
    _
  // Predicated region
  $region26: #{basic_block_forward.1} parent=0 // pred_check
    _
  $region27: #{basic_block_forward.1} parent=0 // pred_check_branch
    %1110 = sbr.rel (0) target = $region29
  $region28: #{basic_block_forward.1} parent=0 // pred_region
    _
  $region29: #{basic_block_forward.1} parent=0 // pred_fallthru
    _

</llo_original>
